<compile_context>
chip_gen: v6e
topology: v6e:2x2x1
jax: 0.10.0
libtpu: 0.0.40
codegen_flags: <defaults>
</compile_context>

<pallas_src>
import functools

import jax
import jax.numpy as jnp
from jax.experimental import pallas as pl
from jax.experimental.pallas import tpu as pltpu


# ---------------------------------------------------------------------------
# Small-N kernel (N < 128): batch-folded gram, lane-dense flat output.
# ---------------------------------------------------------------------------
def _graph_kernel_small(x_ref, w_ref, b_ref, out_ref, *,
                        out_pad, gram_dtype, approx_recip):
    # x_ref:   (Bt, N, Din)
    # w_ref:   (H, Din)    linear weight in native PyTorch layout
    # b_ref:   (1, H)
    # out_ref: (Bt, P)     P = N*N + out_pad   (lane-dense flattened adjacency)
    Bt, N, Din = x_ref.shape
    M = Bt * N
    NN = N * N

    # ---- Linear over all Bt*N rows at once (one MXU pass, x @ W^T). --------
    # NOTE: this reshape is layout-free when N % 8 == 0; otherwise Mosaic
    # inserts a (correct) relayout copy.
    x2d = x_ref[...].reshape(M, Din)
    h = jax.lax.dot_general(x2d, w_ref[...],
                            dimension_numbers=(((1,), (1,)), ((), ())),
                            preferred_element_type=jnp.float32)
    h = (h + b_ref[...]).astype(gram_dtype)                       # (M, H)

    # ---- Batch-folded gram: one (M, H) x (H, M) matmul fills the MXU. ------
    g = jax.lax.dot_general(h, h,
                            dimension_numbers=(((1,), (1,)), ((), ())),
                            preferred_element_type=jnp.float32)   # (M, M)

    row = jax.lax.broadcasted_iota(jnp.int32, (M, M), 0)
    col = jax.lax.broadcasted_iota(jnp.int32, (M, M), 1)
    diag = row == col
    # Within-batch (block-diagonal) mask without integer division:
    # floor((i + 0.5) / N) == i // N exactly for the integer range used here.
    inv_n = jnp.float32(1.0 / N)
    rblk = jnp.floor((row.astype(jnp.float32) + 0.5) * inv_n)
    cblk = jnp.floor((col.astype(jnp.float32) + 0.5) * inv_n)
    same = rblk == cblk

    # ---- Reference math: leaky_relu(A - 1e8*I), softmax(-1), + I. ----------
    g = jnp.where(diag, g - 1e8, g)
    g = jnp.where(g >= 0.0, g, 0.01 * g)
    g = jnp.where(same, g, -1e30)            # cross-batch logits -> exp == 0
    g = g - jnp.max(g, axis=-1, keepdims=True)
    e = jnp.where(same, jnp.exp(g), 0.0)
    denom = jnp.sum(e, axis=-1, keepdims=True)
    if approx_recip:
        p = e * pl.reciprocal(denom, approx=True)   # EUP slot, ~free
    else:
        p = e / denom
    p = jnp.where(diag, p + 1.0, p)                              # + I

    # ---- Extract the block-diagonal (Bt, N, N). -----------------------------
    # Cross-batch entries of p are exactly zero, so p @ S with
    # S[k, j] = [k mod N == j] folds every row's within-batch block into
    # column j (a tiny MXU matmul; no gathers, no minor-dim reshape).
    k = jax.lax.broadcasted_iota(jnp.int32, (M, N), 0)
    j = jax.lax.broadcasted_iota(jnp.int32, (M, N), 1)
    kblk = jnp.floor((k.astype(jnp.float32) + 0.5) * inv_n).astype(jnp.int32)
    kmod = k - N * kblk
    S = jnp.where(kmod == j, 1.0, 0.0)                           # (M, N) f32
    adj = jax.lax.dot_general(p, S,
                              dimension_numbers=(((1,), (0,)), ((), ())),
                              preferred_element_type=jnp.float32)  # (M, N)
    adj = adj.reshape(Bt, N, N)              # sublane split: layout free

    # ---- Lane-dense store: flatten each (N, N) block into one N*N row so the
    # HBM writeback is a dense DMA (vs N masked partial-row stores). ---------
    for i in range(N):                       # static unroll (N < 128)
        out_ref[:, i * N:(i + 1) * N] = adj[:, i, :]
    if out_pad:
        out_ref[:, NN:] = jnp.zeros((Bt, out_pad), jnp.float32)


# ---------------------------------------------------------------------------
# Large-N kernel (N >= 128): rows are already lane-dense; keep 3-D output.
# ---------------------------------------------------------------------------
def _graph_kernel_large(x_ref, w_ref, b_ref, out_ref, *,
                        gram_dtype, approx_recip):
    # x_ref: (Bt, N, Din); out_ref: (Bt, N, N)
    Bt, N, Din = x_ref.shape
    H = w_ref.shape[0]

    x2d = x_ref[...].reshape(Bt * N, Din)
    h = jax.lax.dot_general(x2d, w_ref[...],
                            dimension_numbers=(((1,), (1,)), ((), ())),
                            preferred_element_type=jnp.float32)
    h = (h + b_ref[...]).reshape(Bt, N, H).astype(gram_dtype)

    adj = jnp.einsum("bnd,bmd->bnm", h, h,
                     preferred_element_type=jnp.float32)          # (Bt, N, N)

    row = jax.lax.broadcasted_iota(jnp.int32, (N, N), 0)
    col = jax.lax.broadcasted_iota(jnp.int32, (N, N), 1)
    diag = row == col                        # (N, N), broadcasts over batch

    adj = jnp.where(diag, adj - 1e8, adj)
    adj = jnp.where(adj >= 0.0, adj, 0.01 * adj)
    adj = adj - jnp.max(adj, axis=-1, keepdims=True)
    e = jnp.exp(adj)
    denom = jnp.sum(e, axis=-1, keepdims=True)
    if approx_recip:
        p = e * pl.reciprocal(denom, approx=True)
    else:
        p = e / denom
    out_ref[...] = jnp.where(diag, p + 1.0, p)


# ---------------------------------------------------------------------------
# Wrapper
# ---------------------------------------------------------------------------
def dot_graph_construction(node_features, weight, bias, *, block_bs=None,
                           gram_dtype=jnp.float32, approx_reciprocal=True):
    """node_features: (bs, N, Din); weight: (H, Din) (PyTorch layout); bias: (H,).

    gram_dtype=jnp.bfloat16 is the recommended setting on v6e/v7x when
    downstream tolerates it; approx_reciprocal=False gives an exact softmax.
    """
    bs, N, Din = node_features.shape
    H, Din_w = weight.shape
    assert Din_w == Din, "weight must be (hidden_dim, input_dim)"
    NN = N * N

    # ---- Generation-aware VMEM budgeting (v7x has only 64 MiB / TC). -------
    try:
        vmem_cap = int(pltpu.get_tpu_info().vmem_capacity_bytes)
    except Exception:
        vmem_cap = 64 * 1024 * 1024                  # assume smallest (v7x)
    vmem_limit = min(48 * 1024 * 1024, (3 * vmem_cap) // 4)
    budget = min(vmem_limit // 2, 24 * 1024 * 1024)  # per-step working set

    small_n = N < 128

    if small_n:
        P = pl.cdiv(NN, 128) * 128                   # lane-dense flat row
        out_pad = P - NN

        def fits(bb):
            m = bb * N
            # 2x double-buffered in/out blocks + h + ~6 (M, M) f32 planes.
            return 4 * (2 * bb * N * Din + 2 * bb * P + m * H + 6 * m * m) <= budget

        if block_bs is None:
            block_bs = max(1, min(bs, 512 // N))     # keep folded gram <= 512 wide
            while block_bs > 1 and not fits(block_bs):
                block_bs -= 1
            if block_bs >= bs and bs >= 2:           # >= 2 grid steps for v7x 2 TCs
                block_bs = pl.cdiv(bs, 2)
    else:
        # Per-batch working set: double-buffered in/out blocks + h + adj/exp.
        per_batch = 4 * (2 * N * Din + 2 * NN + N * H + 4 * NN)
        if block_bs is None:
            block_bs = max(1, min(bs, budget // max(per_batch, 1)))
            if block_bs >= bs and bs >= 2:
                block_bs = pl.cdiv(bs, 2)

    nb = pl.cdiv(bs, block_bs)
    bs_pad = nb * block_bs
    x = node_features
    if bs_pad != bs:     # pad instead of degrading block_bs to a divisor of bs
        x = jnp.pad(x, ((0, bs_pad - bs), (0, 0), (0, 0)))
    b2d = bias.reshape(1, H)

    in_specs = [
        pl.BlockSpec((block_bs, N, Din), lambda b: (b, 0, 0)),
        pl.BlockSpec((H, Din), lambda b: (0, 0)),
        pl.BlockSpec((1, H), lambda b: (0, 0)),
    ]
    cparams = pltpu.CompilerParams(dimension_semantics=("parallel",),
                                   vmem_limit_bytes=vmem_limit)

    if small_n:
        kernel = functools.partial(_graph_kernel_small, out_pad=out_pad,
                                   gram_dtype=gram_dtype,
                                   approx_recip=approx_reciprocal)
        out = pl.pallas_call(
            kernel,
            out_shape=jax.ShapeDtypeStruct((nb, block_bs, P), jnp.float32),
            grid_spec=pltpu.PrefetchScalarGridSpec(
                num_scalar_prefetch=0, grid=(nb,),
                in_specs=in_specs,
                out_specs=pl.BlockSpec((None, block_bs, P), lambda b: (b, 0, 0))),
            compiler_params=cparams,
        )(x, weight, b2d)
        # Free contiguous reshapes / slice in XLA.
        return out.reshape(bs_pad, P)[:bs, :NN].reshape(bs, N, N)
    else:
        kernel = functools.partial(_graph_kernel_large, gram_dtype=gram_dtype,
                                   approx_recip=approx_reciprocal)
        out = pl.pallas_call(
            kernel,
            out_shape=jax.ShapeDtypeStruct((bs_pad, N, N), jnp.float32),
            grid_spec=pltpu.PrefetchScalarGridSpec(
                num_scalar_prefetch=0, grid=(nb,),
                in_specs=in_specs,
                out_specs=pl.BlockSpec((block_bs, N, N), lambda b: (b, 0, 0))),
            compiler_params=cparams,
        )(x, weight, b2d)
        return out[:bs]


if __name__ == "__main__":
    # Small shapes consistent with the module's forward.
    bs, N, input_dim, hidden_dim = 4, 16, 32, 32

    key = jax.random.PRNGKey(0)
    kx, kw, kb = jax.random.split(key, 3)

    x = jax.random.normal(kx, (bs, N, input_dim), dtype=jnp.float32)
    bound = 1.0 / (input_dim ** 0.5)
    weight = jax.random.uniform(kw, (hidden_dim, input_dim),
                                minval=-bound, maxval=bound, dtype=jnp.float32)
    bias = jax.random.uniform(kb, (hidden_dim,),
                              minval=-bound, maxval=bound, dtype=jnp.float32)

    # Pure-JAX reference.
    h_ref = x @ weight.T + bias
    adj_ref = jnp.einsum("bnd,bmd->bnm", h_ref, h_ref)
    eye = jnp.eye(N, dtype=jnp.float32)
    adj_ref = adj_ref - eye * 1e8
    adj_ref = jnp.where(adj_ref >= 0, adj_ref, 0.01 * adj_ref)
    adj_ref = jax.nn.softmax(adj_ref, axis=-1) + eye

    # Exact-reciprocal run: strict check against the reference.
    out_exact = dot_graph_construction(x, weight, bias, approx_reciprocal=False)
    jax.block_until_ready(out_exact)
    assert out_exact.shape == (bs, N, N)
    assert jnp.allclose(out_exact, adj_ref, atol=1e-4, rtol=1e-4), \
        "mismatch vs reference (exact reciprocal)"

    # Default (approx EUP reciprocal) run: looser smoke check.
    out_fast = dot_graph_construction(x, weight, bias)
    jax.block_until_ready(out_fast)
    assert jnp.allclose(out_fast, adj_ref, atol=5e-2, rtol=5e-2), \
        "mismatch vs reference (approx reciprocal)"

    print("KERNEL_OK")
</pallas_src>

<mosaic_0001>
module attributes {stable_mosaic.version = 11 : i64} {
  func.func @_graph_kernel_small(%arg0: i32, %arg1: memref<2x16x32xf32, #tpu.memory_space<vmem>>, %arg2: memref<32x32xf32, #tpu.memory_space<vmem>>, %arg3: memref<1x32xf32, #tpu.memory_space<vmem>>, %arg4: memref<1x2x256xf32, #tpu.memory_space<vmem>>) attributes {dimension_semantics = [#tpu.dimension_semantics<parallel>], iteration_bounds = array<i64: 2>, scalar_prefetch = 0 : i64, scratch_operands = 0 : i64, tpu.core_type = #tpu.core_type<tc>, window_params = [{transform_indices = @transform_0, window_bounds = array<i64: 2, 16, 32>}, {pipeline_mode = #tpu.pipeline_mode<synchronous>, transform_indices = @transform_1, window_bounds = array<i64: 32, 32>}, {pipeline_mode = #tpu.pipeline_mode<synchronous>, transform_indices = @transform_2, window_bounds = array<i64: 1, 32>}, {transform_indices = @transform_3, window_bounds = array<i64: 1, 2, 256>}]} {
    %c0 = arith.constant 0 : index
    %c0_0 = arith.constant 0 : index
    %c0_1 = arith.constant 0 : index
    %0 = vector.load %arg1[%c0, %c0_0, %c0_1] : memref<2x16x32xf32, #tpu.memory_space<vmem>>, vector<2x16x32xf32>
    %1 = vector.shape_cast %0 : vector<2x16x32xf32> to vector<32x32xf32>
    %c0_2 = arith.constant 0 : index
    %c0_3 = arith.constant 0 : index
    %2 = vector.load %arg2[%c0_2, %c0_3] : memref<32x32xf32, #tpu.memory_space<vmem>>, vector<32x32xf32>
    %cst = arith.constant dense<0.000000e+00> : vector<32x32xf32>
    %3 = tpu.matmul %1, %2, %cst {dimension_numbers = #tpu.dot_dimension_numbers<[1], [1], [0], [0], [0, 0, 1, 0], [], []>} : vector<32x32xf32>, vector<32x32xf32>, vector<32x32xf32> -> vector<32x32xf32>
    %c0_4 = arith.constant 0 : index
    %c0_5 = arith.constant 0 : index
    %4 = vector.load %arg3[%c0_4, %c0_5] : memref<1x32xf32, #tpu.memory_space<vmem>>, vector<1x32xf32>
    %5 = vector.broadcast %4 : vector<1x32xf32> to vector<32x32xf32>
    %6 = arith.addf %3, %5 : vector<32x32xf32>
    %cst_6 = arith.constant dense<0.000000e+00> : vector<32x32xf32>
    %7 = tpu.matmul %6, %6, %cst_6 {dimension_numbers = #tpu.dot_dimension_numbers<[1], [1], [0], [0], [0, 0, 1, 0], [], []>} : vector<32x32xf32>, vector<32x32xf32>, vector<32x32xf32> -> vector<32x32xf32>
    %8 = tpu.iota {dimensions = array<i32: 0>} : vector<32x32xi32>
    %9 = tpu.iota {dimensions = array<i32: 1>} : vector<32x32xi32>
    %10 = arith.cmpi eq, %8, %9 : vector<32x32xi32>
    %11 = arith.sitofp %8 : vector<32x32xi32> to vector<32x32xf32>
    %cst_7 = arith.constant 5.000000e-01 : f32
    %12 = vector.broadcast %cst_7 : f32 to vector<32x32xf32>
    %13 = arith.addf %11, %12 : vector<32x32xf32>
    %cst_8 = arith.constant 6.250000e-02 : f32
    %14 = vector.broadcast %cst_8 : f32 to vector<32x32xf32>
    %15 = arith.mulf %13, %14 : vector<32x32xf32>
    %16 = math.floor %15 : vector<32x32xf32>
    %17 = arith.sitofp %9 : vector<32x32xi32> to vector<32x32xf32>
    %cst_9 = arith.constant 5.000000e-01 : f32
    %18 = vector.broadcast %cst_9 : f32 to vector<32x32xf32>
    %19 = arith.addf %17, %18 : vector<32x32xf32>
    %cst_10 = arith.constant 6.250000e-02 : f32
    %20 = vector.broadcast %cst_10 : f32 to vector<32x32xf32>
    %21 = arith.mulf %19, %20 : vector<32x32xf32>
    %22 = math.floor %21 : vector<32x32xf32>
    %23 = arith.cmpf oeq, %16, %22 : vector<32x32xf32>
    %cst_11 = arith.constant 1.000000e+08 : f32
    %24 = vector.broadcast %cst_11 : f32 to vector<32x32xf32>
    %25 = arith.subf %7, %24 : vector<32x32xf32>
    %26 = arith.select %10, %25, %7 : vector<32x32xi1>, vector<32x32xf32>
    %cst_12 = arith.constant 0.000000e+00 : f32
    %27 = vector.broadcast %cst_12 : f32 to vector<32x32xf32>
    %28 = arith.cmpf oge, %26, %27 : vector<32x32xf32>
    %cst_13 = arith.constant 0.00999999977 : f32
    %29 = vector.broadcast %cst_13 : f32 to vector<32x32xf32>
    %30 = arith.mulf %29, %26 : vector<32x32xf32>
    %31 = arith.select %28, %26, %30 : vector<32x32xi1>, vector<32x32xf32>
    %cst_14 = arith.constant -1.000000e+30 : f32
    %32 = vector.broadcast %cst_14 : f32 to vector<32x32xf32>
    %33 = arith.select %23, %31, %32 : vector<32x32xi1>, vector<32x32xf32>
    %cst_15 = arith.constant dense<0xFF800000> : vector<32xf32>
    %34 = vector.multi_reduction <maximumf>, %33, %cst_15 [1] : vector<32x32xf32> to vector<32xf32>
    %35 = vector.shape_cast %34 : vector<32xf32> to vector<32x1xf32>
    %36 = vector.broadcast %35 : vector<32x1xf32> to vector<32x32xf32>
    %37 = arith.subf %33, %36 : vector<32x32xf32>
    %38 = math.exp %37 : vector<32x32xf32>
    %cst_16 = arith.constant 0.000000e+00 : f32
    %39 = vector.broadcast %cst_16 : f32 to vector<32x32xf32>
    %40 = arith.select %23, %38, %39 : vector<32x32xi1>, vector<32x32xf32>
    %cst_17 = arith.constant dense<0.000000e+00> : vector<32xf32>
    %41 = vector.multi_reduction <add>, %40, %cst_17 [1] : vector<32x32xf32> to vector<32xf32>
    %42 = vector.shape_cast %41 : vector<32xf32> to vector<32x1xf32>
    %43 = vector.broadcast %42 : vector<32x1xf32> to vector<32x32xf32>
    %44 = arith.divf %40, %43 : vector<32x32xf32>
    %cst_18 = arith.constant 1.000000e+00 : f32
    %45 = vector.broadcast %cst_18 : f32 to vector<32x32xf32>
    %46 = arith.addf %44, %45 : vector<32x32xf32>
    %47 = arith.select %10, %46, %44 : vector<32x32xi1>, vector<32x32xf32>
    %48 = tpu.iota {dimensions = array<i32: 0>} : vector<32x16xi32>
    %49 = tpu.iota {dimensions = array<i32: 1>} : vector<32x16xi32>
    %50 = arith.sitofp %48 : vector<32x16xi32> to vector<32x16xf32>
    %cst_19 = arith.constant 5.000000e-01 : f32
    %51 = vector.broadcast %cst_19 : f32 to vector<32x16xf32>
    %52 = arith.addf %50, %51 : vector<32x16xf32>
    %cst_20 = arith.constant 6.250000e-02 : f32
    %53 = vector.broadcast %cst_20 : f32 to vector<32x16xf32>
    %54 = arith.mulf %52, %53 : vector<32x16xf32>
    %55 = math.floor %54 : vector<32x16xf32>
    %56 = arith.fptosi %55 : vector<32x16xf32> to vector<32x16xi32>
    %c16_i32 = arith.constant 16 : i32
    %57 = vector.broadcast %c16_i32 : i32 to vector<32x16xi32>
    %58 = arith.muli %57, %56 : vector<32x16xi32>
    %59 = arith.subi %48, %58 : vector<32x16xi32>
    %60 = arith.cmpi eq, %59, %49 : vector<32x16xi32>
    %cst_21 = arith.constant 1.000000e+00 : f32
    %cst_22 = arith.constant 0.000000e+00 : f32
    %61 = vector.broadcast %cst_21 : f32 to vector<32x16xf32>
    %62 = vector.broadcast %cst_22 : f32 to vector<32x16xf32>
    %63 = arith.select %60, %61, %62 : vector<32x16xi1>, vector<32x16xf32>
    %cst_23 = arith.constant dense<0.000000e+00> : vector<32x16xf32>
    %64 = tpu.matmul %47, %63, %cst_23 {dimension_numbers = #tpu.dot_dimension_numbers<[1], [0], [0], [1], [0, 0, 1, 1], [], []>} : vector<32x32xf32>, vector<32x16xf32>, vector<32x16xf32> -> vector<32x16xf32>
    %65 = vector.shape_cast %64 : vector<32x16xf32> to vector<2x16x16xf32>
    %66 = vector.extract_strided_slice %65 {offsets = [0, 0, 0], sizes = [2, 1, 16], strides = [1, 1, 1]} : vector<2x16x16xf32> to vector<2x1x16xf32>
    %67 = vector.shape_cast %66 : vector<2x1x16xf32> to vector<2x16xf32>
    %c0_24 = arith.constant 0 : index
    %c0_25 = arith.constant 0 : index
    %c0_26 = arith.constant 0 : index
    %68 = vector.load %arg4[%c0_24, %c0_25, %c0_26] : memref<1x2x256xf32, #tpu.memory_space<vmem>>, vector<1x2x16xf32>
    %69 = vector.shape_cast %68 : vector<1x2x16xf32> to vector<2x16xf32>
    %70 = vector.shape_cast %67 : vector<2x16xf32> to vector<1x2x16xf32>
    tpu.vector_store %arg4[%c0_24, %c0_25, %c0_26], %70 {strides = array<i32>} : memref<1x2x256xf32, #tpu.memory_space<vmem>>, vector<1x2x16xf32>,
    %71 = vector.extract_strided_slice %65 {offsets = [0, 1, 0], sizes = [2, 1, 16], strides = [1, 1, 1]} : vector<2x16x16xf32> to vector<2x1x16xf32>
    %72 = vector.shape_cast %71 : vector<2x1x16xf32> to vector<2x16xf32>
    %c0_27 = arith.constant 0 : index
    %c0_28 = arith.constant 0 : index
    %c16 = arith.constant 16 : index
    %73 = vector.load %arg4[%c0_27, %c0_28, %c16] : memref<1x2x256xf32, #tpu.memory_space<vmem>>, vector<1x2x16xf32>
    %74 = vector.shape_cast %73 : vector<1x2x16xf32> to vector<2x16xf32>
    %75 = vector.shape_cast %72 : vector<2x16xf32> to vector<1x2x16xf32>
    tpu.vector_store %arg4[%c0_27, %c0_28, %c16], %75 {strides = array<i32>} : memref<1x2x256xf32, #tpu.memory_space<vmem>>, vector<1x2x16xf32>,
    %76 = vector.extract_strided_slice %65 {offsets = [0, 2, 0], sizes = [2, 1, 16], strides = [1, 1, 1]} : vector<2x16x16xf32> to vector<2x1x16xf32>
    %77 = vector.shape_cast %76 : vector<2x1x16xf32> to vector<2x16xf32>
    %c0_29 = arith.constant 0 : index
    %c0_30 = arith.constant 0 : index
    %c32 = arith.constant 32 : index
    %78 = vector.load %arg4[%c0_29, %c0_30, %c32] : memref<1x2x256xf32, #tpu.memory_space<vmem>>, vector<1x2x16xf32>
    %79 = vector.shape_cast %78 : vector<1x2x16xf32> to vector<2x16xf32>
    %80 = vector.shape_cast %77 : vector<2x16xf32> to vector<1x2x16xf32>
    tpu.vector_store %arg4[%c0_29, %c0_30, %c32], %80 {strides = array<i32>} : memref<1x2x256xf32, #tpu.memory_space<vmem>>, vector<1x2x16xf32>,
    %81 = vector.extract_strided_slice %65 {offsets = [0, 3, 0], sizes = [2, 1, 16], strides = [1, 1, 1]} : vector<2x16x16xf32> to vector<2x1x16xf32>
    %82 = vector.shape_cast %81 : vector<2x1x16xf32> to vector<2x16xf32>
    %c0_31 = arith.constant 0 : index
    %c0_32 = arith.constant 0 : index
    %c48 = arith.constant 48 : index
    %83 = vector.load %arg4[%c0_31, %c0_32, %c48] : memref<1x2x256xf32, #tpu.memory_space<vmem>>, vector<1x2x16xf32>
    %84 = vector.shape_cast %83 : vector<1x2x16xf32> to vector<2x16xf32>
    %85 = vector.shape_cast %82 : vector<2x16xf32> to vector<1x2x16xf32>
    tpu.vector_store %arg4[%c0_31, %c0_32, %c48], %85 {strides = array<i32>} : memref<1x2x256xf32, #tpu.memory_space<vmem>>, vector<1x2x16xf32>,
    %86 = vector.extract_strided_slice %65 {offsets = [0, 4, 0], sizes = [2, 1, 16], strides = [1, 1, 1]} : vector<2x16x16xf32> to vector<2x1x16xf32>
    %87 = vector.shape_cast %86 : vector<2x1x16xf32> to vector<2x16xf32>
    %c0_33 = arith.constant 0 : index
    %c0_34 = arith.constant 0 : index
    %c64 = arith.constant 64 : index
    %88 = vector.load %arg4[%c0_33, %c0_34, %c64] : memref<1x2x256xf32, #tpu.memory_space<vmem>>, vector<1x2x16xf32>
    %89 = vector.shape_cast %88 : vector<1x2x16xf32> to vector<2x16xf32>
    %90 = vector.shape_cast %87 : vector<2x16xf32> to vector<1x2x16xf32>
    tpu.vector_store %arg4[%c0_33, %c0_34, %c64], %90 {strides = array<i32>} : memref<1x2x256xf32, #tpu.memory_space<vmem>>, vector<1x2x16xf32>,
    %91 = vector.extract_strided_slice %65 {offsets = [0, 5, 0], sizes = [2, 1, 16], strides = [1, 1, 1]} : vector<2x16x16xf32> to vector<2x1x16xf32>
    %92 = vector.shape_cast %91 : vector<2x1x16xf32> to vector<2x16xf32>
    %c0_35 = arith.constant 0 : index
    %c0_36 = arith.constant 0 : index
    %c80 = arith.constant 80 : index
    %93 = vector.load %arg4[%c0_35, %c0_36, %c80] : memref<1x2x256xf32, #tpu.memory_space<vmem>>, vector<1x2x16xf32>
    %94 = vector.shape_cast %93 : vector<1x2x16xf32> to vector<2x16xf32>
    %95 = vector.shape_cast %92 : vector<2x16xf32> to vector<1x2x16xf32>
    tpu.vector_store %arg4[%c0_35, %c0_36, %c80], %95 {strides = array<i32>} : memref<1x2x256xf32, #tpu.memory_space<vmem>>, vector<1x2x16xf32>,
    %96 = vector.extract_strided_slice %65 {offsets = [0, 6, 0], sizes = [2, 1, 16], strides = [1, 1, 1]} : vector<2x16x16xf32> to vector<2x1x16xf32>
    %97 = vector.shape_cast %96 : vector<2x1x16xf32> to vector<2x16xf32>
    %c0_37 = arith.constant 0 : index
    %c0_38 = arith.constant 0 : index
    %c96 = arith.constant 96 : index
    %98 = vector.load %arg4[%c0_37, %c0_38, %c96] : memref<1x2x256xf32, #tpu.memory_space<vmem>>, vector<1x2x16xf32>
    %99 = vector.shape_cast %98 : vector<1x2x16xf32> to vector<2x16xf32>
    %100 = vector.shape_cast %97 : vector<2x16xf32> to vector<1x2x16xf32>
    tpu.vector_store %arg4[%c0_37, %c0_38, %c96], %100 {strides = array<i32>} : memref<1x2x256xf32, #tpu.memory_space<vmem>>, vector<1x2x16xf32>,
    %101 = vector.extract_strided_slice %65 {offsets = [0, 7, 0], sizes = [2, 1, 16], strides = [1, 1, 1]} : vector<2x16x16xf32> to vector<2x1x16xf32>
    %102 = vector.shape_cast %101 : vector<2x1x16xf32> to vector<2x16xf32>
    %c0_39 = arith.constant 0 : index
    %c0_40 = arith.constant 0 : index
    %c112 = arith.constant 112 : index
    %103 = vector.load %arg4[%c0_39, %c0_40, %c112] : memref<1x2x256xf32, #tpu.memory_space<vmem>>, vector<1x2x16xf32>
    %104 = vector.shape_cast %103 : vector<1x2x16xf32> to vector<2x16xf32>
    %105 = vector.shape_cast %102 : vector<2x16xf32> to vector<1x2x16xf32>
    tpu.vector_store %arg4[%c0_39, %c0_40, %c112], %105 {strides = array<i32>} : memref<1x2x256xf32, #tpu.memory_space<vmem>>, vector<1x2x16xf32>,
    %106 = vector.extract_strided_slice %65 {offsets = [0, 8, 0], sizes = [2, 1, 16], strides = [1, 1, 1]} : vector<2x16x16xf32> to vector<2x1x16xf32>
    %107 = vector.shape_cast %106 : vector<2x1x16xf32> to vector<2x16xf32>
    %c0_41 = arith.constant 0 : index
    %c0_42 = arith.constant 0 : index
    %c128 = arith.constant 128 : index
    %108 = vector.load %arg4[%c0_41, %c0_42, %c128] : memref<1x2x256xf32, #tpu.memory_space<vmem>>, vector<1x2x16xf32>
    %109 = vector.shape_cast %108 : vector<1x2x16xf32> to vector<2x16xf32>
    %110 = vector.shape_cast %107 : vector<2x16xf32> to vector<1x2x16xf32>
    tpu.vector_store %arg4[%c0_41, %c0_42, %c128], %110 {strides = array<i32>} : memref<1x2x256xf32, #tpu.memory_space<vmem>>, vector<1x2x16xf32>,
    %111 = vector.extract_strided_slice %65 {offsets = [0, 9, 0], sizes = [2, 1, 16], strides = [1, 1, 1]} : vector<2x16x16xf32> to vector<2x1x16xf32>
    %112 = vector.shape_cast %111 : vector<2x1x16xf32> to vector<2x16xf32>
    %c0_43 = arith.constant 0 : index
    %c0_44 = arith.constant 0 : index
    %c144 = arith.constant 144 : index
    %113 = vector.load %arg4[%c0_43, %c0_44, %c144] : memref<1x2x256xf32, #tpu.memory_space<vmem>>, vector<1x2x16xf32>
    %114 = vector.shape_cast %113 : vector<1x2x16xf32> to vector<2x16xf32>
    %115 = vector.shape_cast %112 : vector<2x16xf32> to vector<1x2x16xf32>
    tpu.vector_store %arg4[%c0_43, %c0_44, %c144], %115 {strides = array<i32>} : memref<1x2x256xf32, #tpu.memory_space<vmem>>, vector<1x2x16xf32>,
    %116 = vector.extract_strided_slice %65 {offsets = [0, 10, 0], sizes = [2, 1, 16], strides = [1, 1, 1]} : vector<2x16x16xf32> to vector<2x1x16xf32>
    %117 = vector.shape_cast %116 : vector<2x1x16xf32> to vector<2x16xf32>
    %c0_45 = arith.constant 0 : index
    %c0_46 = arith.constant 0 : index
    %c160 = arith.constant 160 : index
    %118 = vector.load %arg4[%c0_45, %c0_46, %c160] : memref<1x2x256xf32, #tpu.memory_space<vmem>>, vector<1x2x16xf32>
    %119 = vector.shape_cast %118 : vector<1x2x16xf32> to vector<2x16xf32>
    %120 = vector.shape_cast %117 : vector<2x16xf32> to vector<1x2x16xf32>
    tpu.vector_store %arg4[%c0_45, %c0_46, %c160], %120 {strides = array<i32>} : memref<1x2x256xf32, #tpu.memory_space<vmem>>, vector<1x2x16xf32>,
    %121 = vector.extract_strided_slice %65 {offsets = [0, 11, 0], sizes = [2, 1, 16], strides = [1, 1, 1]} : vector<2x16x16xf32> to vector<2x1x16xf32>
    %122 = vector.shape_cast %121 : vector<2x1x16xf32> to vector<2x16xf32>
    %c0_47 = arith.constant 0 : index
    %c0_48 = arith.constant 0 : index
    %c176 = arith.constant 176 : index
    %123 = vector.load %arg4[%c0_47, %c0_48, %c176] : memref<1x2x256xf32, #tpu.memory_space<vmem>>, vector<1x2x16xf32>
    %124 = vector.shape_cast %123 : vector<1x2x16xf32> to vector<2x16xf32>
    %125 = vector.shape_cast %122 : vector<2x16xf32> to vector<1x2x16xf32>
    tpu.vector_store %arg4[%c0_47, %c0_48, %c176], %125 {strides = array<i32>} : memref<1x2x256xf32, #tpu.memory_space<vmem>>, vector<1x2x16xf32>,
    %126 = vector.extract_strided_slice %65 {offsets = [0, 12, 0], sizes = [2, 1, 16], strides = [1, 1, 1]} : vector<2x16x16xf32> to vector<2x1x16xf32>
    %127 = vector.shape_cast %126 : vector<2x1x16xf32> to vector<2x16xf32>
    %c0_49 = arith.constant 0 : index
    %c0_50 = arith.constant 0 : index
    %c192 = arith.constant 192 : index
    %128 = vector.load %arg4[%c0_49, %c0_50, %c192] : memref<1x2x256xf32, #tpu.memory_space<vmem>>, vector<1x2x16xf32>
    %129 = vector.shape_cast %128 : vector<1x2x16xf32> to vector<2x16xf32>
    %130 = vector.shape_cast %127 : vector<2x16xf32> to vector<1x2x16xf32>
    tpu.vector_store %arg4[%c0_49, %c0_50, %c192], %130 {strides = array<i32>} : memref<1x2x256xf32, #tpu.memory_space<vmem>>, vector<1x2x16xf32>,
    %131 = vector.extract_strided_slice %65 {offsets = [0, 13, 0], sizes = [2, 1, 16], strides = [1, 1, 1]} : vector<2x16x16xf32> to vector<2x1x16xf32>
    %132 = vector.shape_cast %131 : vector<2x1x16xf32> to vector<2x16xf32>
    %c0_51 = arith.constant 0 : index
    %c0_52 = arith.constant 0 : index
    %c208 = arith.constant 208 : index
    %133 = vector.load %arg4[%c0_51, %c0_52, %c208] : memref<1x2x256xf32, #tpu.memory_space<vmem>>, vector<1x2x16xf32>
    %134 = vector.shape_cast %133 : vector<1x2x16xf32> to vector<2x16xf32>
    %135 = vector.shape_cast %132 : vector<2x16xf32> to vector<1x2x16xf32>
    tpu.vector_store %arg4[%c0_51, %c0_52, %c208], %135 {strides = array<i32>} : memref<1x2x256xf32, #tpu.memory_space<vmem>>, vector<1x2x16xf32>,
    %136 = vector.extract_strided_slice %65 {offsets = [0, 14, 0], sizes = [2, 1, 16], strides = [1, 1, 1]} : vector<2x16x16xf32> to vector<2x1x16xf32>
    %137 = vector.shape_cast %136 : vector<2x1x16xf32> to vector<2x16xf32>
    %c0_53 = arith.constant 0 : index
    %c0_54 = arith.constant 0 : index
    %c224 = arith.constant 224 : index
    %138 = vector.load %arg4[%c0_53, %c0_54, %c224] : memref<1x2x256xf32, #tpu.memory_space<vmem>>, vector<1x2x16xf32>
    %139 = vector.shape_cast %138 : vector<1x2x16xf32> to vector<2x16xf32>
    %140 = vector.shape_cast %137 : vector<2x16xf32> to vector<1x2x16xf32>
    tpu.vector_store %arg4[%c0_53, %c0_54, %c224], %140 {strides = array<i32>} : memref<1x2x256xf32, #tpu.memory_space<vmem>>, vector<1x2x16xf32>,
    %141 = vector.extract_strided_slice %65 {offsets = [0, 15, 0], sizes = [2, 1, 16], strides = [1, 1, 1]} : vector<2x16x16xf32> to vector<2x1x16xf32>
    %142 = vector.shape_cast %141 : vector<2x1x16xf32> to vector<2x16xf32>
    %c0_55 = arith.constant 0 : index
    %c0_56 = arith.constant 0 : index
    %c240 = arith.constant 240 : index
    %143 = vector.load %arg4[%c0_55, %c0_56, %c240] : memref<1x2x256xf32, #tpu.memory_space<vmem>>, vector<1x2x16xf32>
    %144 = vector.shape_cast %143 : vector<1x2x16xf32> to vector<2x16xf32>
    %145 = vector.shape_cast %142 : vector<2x16xf32> to vector<1x2x16xf32>
    tpu.vector_store %arg4[%c0_55, %c0_56, %c240], %145 {strides = array<i32>} : memref<1x2x256xf32, #tpu.memory_space<vmem>>, vector<1x2x16xf32>,
    return
  }
  func.func @transform_0(%arg0: i32) -> (i32, i32, i32) {
    %c0_i32 = arith.constant 0 : i32
    %c0_i32_0 = arith.constant 0 : i32
    %c0_i32_1 = arith.constant 0 : i32
    return %arg0, %c0_i32, %c0_i32_0 : i32, i32, i32
  }
  func.func @transform_1(%arg0: i32) -> (i32, i32) {
    %c0_i32 = arith.constant 0 : i32
    %c0_i32_0 = arith.constant 0 : i32
    %c0_i32_1 = arith.constant 0 : i32
    return %c0_i32, %c0_i32_0 : i32, i32
  }
  func.func @transform_2(%arg0: i32) -> (i32, i32) {
    %c0_i32 = arith.constant 0 : i32
    %c0_i32_0 = arith.constant 0 : i32
    %c0_i32_1 = arith.constant 0 : i32
    return %c0_i32, %c0_i32_0 : i32, i32
  }
  func.func @transform_3(%arg0: i32) -> (i32, i32, i32) {
    %c0_i32 = arith.constant 0 : i32
    %c0_i32_0 = arith.constant 0 : i32
    %c0_i32_1 = arith.constant 0 : i32
    return %arg0, %c0_i32, %c0_i32_0 : i32, i32, i32
  }
}

</mosaic_0001>

<llo_original>
// kernel: tpu_custom_call.1
$region0: #{tpu_custom_call.1}
  #allocation0 [shape = 'u32[]', space=smem, size = 0x4, offset = 0x4, fixed_abs, tag = 'smem constant byte address 0x4 - core index']
  #allocation1 [shape = 'u32[144,128]{1,0:T(1,128)}', space=vmem, size = 0x12000, scoped, tag = 'internal scratch']
  %s0 = inlined_call_operand.hbm [shape: f32[4,16,32], index: 0, kind: input, shape index: {}]
  %s1 = inlined_call_operand.hbm [shape: f32[32,32], index: 1, kind: input, shape index: {}]
  %s2 = inlined_call_operand.vmem [shape: f32[1,32], index: 2, kind: input, shape index: {}]
  %s3 = inlined_call_operand.hbm [shape: f32[2,2,256], index: 3, kind: output, shape index: {}]
  %s4 = sld [smem:[#allocation0]]
  $region53: #{tpu_custom_call.1} parent=0
    _
  %s6 = ssub.s32 1, %s4
  %s7 = scalar_select 0, %s6, %s4
  $region1: #{tpu_custom_call.1} parent=0
    #allocation2 [shape = 'u8[32768]{0}', space=vmem, size = 0x8000, scoped, tag = 'input window, operand 0']
    #allocation3 [shape = 's32[2]{0}', space=sflag, size = 0x8, scoped, tag = 'scoped memory for tpu_custom_call.1']
    #allocation4 [shape = 's32[2]{0}', space=sflag, size = 0x8, scoped, tag = 'scoped memory for tpu_custom_call.1']
    #allocation5 [shape = 'u8[16384]{0}', space=vmem, size = 0x4000, scoped, tag = 'input window, operand 1, single buffered']
    #allocation6 [shape = 's32[1]{0}', space=sflag, size = 0x4, scoped, tag = 'scoped memory for tpu_custom_call.1']
    #allocation7 [shape = 'u8[4096]{0}', space=vmem, size = 0x1000, scoped, tag = 'output window, operand 0']
    %8 = vsyncpa [#allocation3], 0
    %s9 = scalar_lea.sflag [#allocation3], 1
    %10 = vsyncpa %s9, 0
    %11 = vsyncpa [#allocation6], 0
    %12 = vsyncpa [#allocation4], 0
    %s13 = scalar_lea.sflag [#allocation4], 1
    %14 = vsyncpa %s13, 0
    loop: start=0, step=1, limit=4
    $region2: #{tpu_custom_call.1} parent=1 // loop_pre_header
      _
    $region3: #{tpu_custom_call.1} parent=1 // loop_header
      %s16 = sphi 0, %s20
      %p17 = scmp.ge.s32.totalorder %s16, 4
      %s26 = sphi 0, %s28
      %s29 = sphi 0, %s26
      %s30 = sphi 0, %s29
      %s46 = sphi 0, %s30
      %s50 = sphi 0, %s50
      %s52 = sphi 0, %s50
      %s53 = sphi 0, %s52
      %s67 = sphi 0, %s53
      %s71 = sphi 0, %s71
      %s73 = sphi 0, %s71
      %s74 = sphi 0, %s73
      %s88 = sphi 0, %s74
      %s94 = sphi 0, %s96
      %s97 = sphi 0, %s94
      %s98 = sphi 0, %s97
      %s114 = sphi 0, %s98
    $region4: #{tpu_custom_call.1} parent=1 // loop_header_branch
      %19 = sbr.rel (%p17) target = $region8
    $region5: #{tpu_custom_call.1} parent=1 // loop_body
      %s21 = ssub.s32 %s16, 1
      %s22 = ssub.s32 %s16, 2
      %s23 = sadd.s32 %s16, 1
      %s24 = ssub.s32 %s16, %s23
      %p25 = scmp.eq.s32.totalorder %s24, 0
      %s27 = sadd.s32 %s26, 1
      %s28 = scalar_select %p25, %s26, %s27
      %p31 = pneg %p25
      %p32 = scmp.eq.s32.totalorder %s16, 1
      %p33 = por %p31, %p32
      %p34 = scmp.ne.s32.totalorder %s26, %s29
      %p35 = scmp.eq.s32.totalorder %s16, 0
      %p36 = por %p34, %p35
      %p37 = scmp.ne.s32.totalorder %s26, %s29
      %p38 = scmp.eq.s32.totalorder %s21, 1
      %p39 = por %p37, %p38
      %p40 = scmp.ne.s32.totalorder %s29, %s30
      %p41 = scmp.eq.s32.totalorder %s21, 0
      %p42 = por %p40, %p41
      %p43 = scmp.ne.s32.totalorder %s29, %s30
      %p44 = scmp.eq.s32.totalorder %s22, 1
      %p45 = por %p43, %p44
      %p47 = scmp.ne.s32.totalorder %s30, %s46
      %p48 = scmp.eq.s32.totalorder %s22, 0
      %p49 = por %p47, %p48
      %s51 = sadd.s32 %s50, 1
      %p54 = scmp.eq.s32.totalorder %s16, 1
      %p55 = scmp.ne.s32.totalorder %s50, %s52
      %p56 = scmp.eq.s32.totalorder %s16, 0
      %p57 = por %p55, %p56
      %p58 = scmp.ne.s32.totalorder %s50, %s52
      %p59 = scmp.eq.s32.totalorder %s21, 1
      %p60 = por %p58, %p59
      %p61 = scmp.ne.s32.totalorder %s52, %s53
      %p62 = scmp.eq.s32.totalorder %s21, 0
      %p63 = por %p61, %p62
      %p64 = scmp.ne.s32.totalorder %s52, %s53
      %p65 = scmp.eq.s32.totalorder %s22, 1
      %p66 = por %p64, %p65
      %p68 = scmp.ne.s32.totalorder %s53, %s67
      %p69 = scmp.eq.s32.totalorder %s22, 0
      %p70 = por %p68, %p69
      %s72 = sadd.s32 %s71, 1
      %p75 = scmp.eq.s32.totalorder %s16, 1
      %p76 = scmp.ne.s32.totalorder %s71, %s73
      %p77 = scmp.eq.s32.totalorder %s16, 0
      %p78 = por %p76, %p77
      %p79 = scmp.ne.s32.totalorder %s71, %s73
      %p80 = scmp.eq.s32.totalorder %s21, 1
      %p81 = por %p79, %p80
      %p82 = scmp.ne.s32.totalorder %s73, %s74
      %p83 = scmp.eq.s32.totalorder %s21, 0
      %p84 = por %p82, %p83
      %p85 = scmp.ne.s32.totalorder %s73, %s74
      %p86 = scmp.eq.s32.totalorder %s22, 1
      %p87 = por %p85, %p86
      %p89 = scmp.ne.s32.totalorder %s74, %s88
      %p90 = scmp.eq.s32.totalorder %s22, 0
      %p91 = por %p89, %p90
      %s92 = ssub.s32 %s16, %s23
      %p93 = scmp.eq.s32.totalorder %s92, 0
      %s95 = sadd.s32 %s94, 1
      %s96 = scalar_select %p93, %s94, %s95
      %p99 = pneg %p93
      %p100 = scmp.eq.s32.totalorder %s16, 1
      %p101 = por %p99, %p100
      %p102 = scmp.ne.s32.totalorder %s94, %s97
      %p103 = scmp.eq.s32.totalorder %s16, 0
      %p104 = por %p102, %p103
      %p105 = scmp.ne.s32.totalorder %s94, %s97
      %p106 = scmp.eq.s32.totalorder %s21, 1
      %p107 = por %p105, %p106
      %p108 = scmp.ne.s32.totalorder %s97, %s98
      %p109 = scmp.eq.s32.totalorder %s21, 0
      %p110 = por %p108, %p109
      %p111 = scmp.ne.s32.totalorder %s97, %s98
      %p112 = scmp.eq.s32.totalorder %s22, 1
      %p113 = por %p111, %p112
      %p115 = scmp.ne.s32.totalorder %s98, %s114
      %p116 = scmp.eq.s32.totalorder %s22, 0
      %p117 = por %p115, %p116
      %p118 = scmp.le.s32.totalorder 1, %s16
      %p119 = scmp.lt.s32.totalorder %s16, 3
      %p120 = pnand %p118, %p119
      %p121 = pneg %p120
      // Predicated region
      $region9: #{tpu_custom_call.1} parent=5 // pred_check
        _
      $region10: #{tpu_custom_call.1} parent=5 // pred_check_branch
        %123 = sbr.rel (%p120) target = $region12
      $region11: #{tpu_custom_call.1} parent=5 // pred_region
        %s124 = ssub.s32 %s16, 1
        // Predicated region
        $region13: #{tpu_custom_call.1} parent=11 // pred_check
          %p125 = pneg %p63
        $region14: #{tpu_custom_call.1} parent=11 // pred_check_branch
          %127 = sbr.rel (%p125) target = $region16
        $region15: #{tpu_custom_call.1} parent=11 // pred_region
          %s129 = ssub.s32 512, 512
          %130 = vsyncadd [#allocation6], %s129
          %s131 = sshll.u32 [#allocation5], 4
          %s132 = int_to_ptr.vmem [resolvable:$true] %s131
          %137 = dma.hbm_to_vmem [thread:$0]  %s1, 512, %s132, [#allocation6], 128, 128, 8
        $region16: #{tpu_custom_call.1} parent=11 // pred_fallthru
          _
        // Predicated region
        $region17: #{tpu_custom_call.1} parent=11 // pred_check
          %p138 = pneg %p84
        $region18: #{tpu_custom_call.1} parent=11 // pred_check_branch
          %140 = sbr.rel (%p138) target = $region20
        $region19: #{tpu_custom_call.1} parent=11 // pred_region
          _
        $region20: #{tpu_custom_call.1} parent=11 // pred_fallthru
          _
      $region12: #{tpu_custom_call.1} parent=5 // pred_fallthru
        _
      %p141 = scmp.lt.s32.totalorder %s16, 2
      // Predicated region
      $region21: #{tpu_custom_call.1} parent=5 // pred_check
        %p142 = pneg %p141
      $region22: #{tpu_custom_call.1} parent=5 // pred_check_branch
        %144 = sbr.rel (%p142) target = $region24
      $region23: #{tpu_custom_call.1} parent=5 // pred_region
        // Predicated region
        $region25: #{tpu_custom_call.1} parent=23 // pred_check
          %p145 = pneg %p36
        $region26: #{tpu_custom_call.1} parent=23 // pred_check_branch
          %147 = sbr.rel (%p145) target = $region28
        $region27: #{tpu_custom_call.1} parent=23 // pred_region
          %s148 = sand.u32 %s26, 1
          %s149 = scalar_lea.sflag [#allocation3], %s148
          %s150 = sand.u32 %s26, 1
          %s151 = smul.addr %s150, 32
          %s152 = scalar_lea.vmem [#allocation2], %s151
          %s153 = smul.u32 2, %s16
          %s155 = ssub.s32 512, 512
          %156 = vsyncadd %s149, %s155
          %s157 = smul.addr %s153, 2
          %s158 = smul.addr %s157, 128
          %s159 = scalar_lea.hbm %s0, %s158
          %s160 = sshll.u32 %s152, 4
          %s161 = int_to_ptr.vmem [resolvable:$true] %s160
          %166 = dma.hbm_to_vmem [thread:$0]  %s159, 512, %s161, %s149, 128, 128, 8
        $region28: #{tpu_custom_call.1} parent=23 // pred_fallthru
          _
      $region24: #{tpu_custom_call.1} parent=5 // pred_fallthru
        _
      %p167 = scmp.le.s32.totalorder 1, %s16
      %p168 = scmp.lt.s32.totalorder %s16, 3
      %p169 = pnand %p167, %p168
      %p170 = pneg %p169
      // Predicated region
      $region29: #{tpu_custom_call.1} parent=5 // pred_check
        _
      $region30: #{tpu_custom_call.1} parent=5 // pred_check_branch
        %172 = sbr.rel (%p169) target = $region32
      $region31: #{tpu_custom_call.1} parent=5 // pred_region
        %s173 = ssub.s32 %s16, 1
        %s174 = sand.u32 %s29, 1
        %s175 = scalar_lea.sflag [#allocation3], %s174
        %s176 = sand.u32 %s29, 1
        %s177 = smul.addr %s176, 32
        %s178 = scalar_lea.vmem [#allocation2], %s177
        // Predicated region
        $region33: #{tpu_custom_call.1} parent=31 // pred_check
          %p179 = pneg %p42
        $region34: #{tpu_custom_call.1} parent=31 // pred_check_branch
          %181 = sbr.rel (%p179) target = $region36
        $region35: #{tpu_custom_call.1} parent=31 // pred_region
          %182 = dma.done %s175, 512
        $region36: #{tpu_custom_call.1} parent=31 // pred_fallthru
          _
        // Predicated region
        $region37: #{tpu_custom_call.1} parent=31 // pred_check
          %p183 = pneg %p63
        $region38: #{tpu_custom_call.1} parent=31 // pred_check_branch
          %185 = sbr.rel (%p183) target = $region40
        $region39: #{tpu_custom_call.1} parent=31 // pred_region
          %186 = dma.done [#allocation6], 512
        $region40: #{tpu_custom_call.1} parent=31 // pred_fallthru
          _
        %s187 = sand.u32 %s29, 1
        %s188 = scalar_lea.sflag [#allocation3], %s187
        %s189 = sand.u32 %s29, 1
        %s190 = smul.addr %s189, 32
        %s191 = scalar_lea.vmem [#allocation2], %s190
        %p192 = pneg %p42
        %p193 = pneg %p39
        %p194 = pneg %p63
        %p195 = pneg %p60
        %p196 = pneg %p84
        %p197 = pneg %p81
        %p198 = pneg %p110
        %p199 = pneg %p107
        %s200 = sand.u32 %s97, 1
        %s201 = scalar_lea.sflag [#allocation4], %s200
        %s202 = sand.u32 %s97, 1
        %s203 = smul.addr %s202, 4
        %s204 = scalar_lea.vmem [#allocation7], %s203
        %s205 = smul.u32 2, %s21
        %v206 = vld [vmem:[%s178] sm:$0xff]
        %v207 = vld [vmem:[%s178 + $0x8] sm:$0xff]
        %v208 = vld [vmem:[%s178 + $0x10] sm:$0xff]
        %v209 = vld [vmem:[%s178 + $0x18] sm:$0xff]
        %v210 = vld [vmem:[#allocation5] sm:$0xff]
        %v211 = vld [vmem:[#allocation5 + $0x8] sm:$0xff]
        %v212 = vld [vmem:[#allocation5 + $0x10] sm:$0xff]
        %v213 = vld [vmem:[#allocation5 + $0x18] sm:$0xff]
        %v214 = vld [vmem:[%s2] sm:$0x1]
        %v216 = vlaneseq
        %v217 = vshrl.u32 %v216, 7
        %v218 = vsub.s32 0, %v217
        %v219 = vrot.slane %v214, %v218
        %vm221 = vcmask 261120
        %v223 = vsel %vm221, %v206, 0
        %v226 = vsel %vm221, %v207, 0
        %v229 = vsel %vm221, %v208, 0
        %v232 = vsel %vm221, %v209, 0
        %v235 = vsel %vm221, %v210, 0
        %v238 = vsel %vm221, %v211, 0
        %v241 = vsel %vm221, %v212, 0
        %v244 = vsel %vm221, %v213, 0
        %246 = vmatprep.subr.mxu0 0.0
        %247 = vmatpush1.xpose.msra.mxu0 0.0
        %248 = vmatprep.subr.mxu0 0.0
        %249 = vmatpush1.xpose.msra.mxu0 0.0
        %250 = vmatprep.subr.mxu0 0.0
        %251 = vmatpush1.xpose.msra.mxu0 0.0
        %252 = vmatprep.subr.mxu0 0.0
        %253 = vmatpush1.xpose.msra.mxu0 0.0
        %254 = vmatprep.subr.mxu0 0.0
        %255 = vmatpush1.xpose.msra.mxu0 0.0
        %256 = vmatprep.subr.mxu0 0.0
        %257 = vmatpush1.xpose.msra.mxu0 0.0
        %258 = vmatprep.subr.mxu0 0.0
        %259 = vmatpush1.xpose.msra.mxu0 0.0
        %260 = vmatprep.subr.mxu0 0.0
        %261 = vmatpush1.xpose.msra.mxu0 0.0
        %262 = vmatprep.subr.mxu0 0.0
        %263 = vmatpush1.xpose.msra.mxu0 0.0
        %264 = vmatprep.subr.mxu0 0.0
        %265 = vmatpush1.xpose.msra.mxu0 0.0
        %266 = vmatprep.subr.mxu0 0.0
        %267 = vmatpush1.xpose.msra.mxu0 0.0
        %268 = vmatprep.subr.mxu0 0.0
        %269 = vmatpush1.xpose.msra.mxu0 0.0
        %270 = vmatprep.subr.mxu0 0.0
        %271 = vmatpush1.xpose.msra.mxu0 %v244
        %272 = vmatprep.subr.mxu0 0.0
        %273 = vmatpush1.xpose.msra.mxu0 %v241
        %274 = vmatprep.subr.mxu0 0.0
        %275 = vmatpush1.xpose.msra.mxu0 %v238
        %276 = vmatprep.subr.mxu0 0.0
        %277 = vmatpush1.xpose.msra.mxu0 %v235
        %278 = vmatprep.subr.mxu0 0.0
        %279 = vmatpush2.xpose.msra.mxu0 0.0
        %280 = vmatprep.subr.mxu0 0.0
        %281 = vmatpush2.xpose.msra.mxu0 0.0
        %282 = vmatprep.subr.mxu0 0.0
        %283 = vmatpush2.xpose.msra.mxu0 0.0
        %284 = vmatprep.subr.mxu0 0.0
        %285 = vmatpush2.xpose.msra.mxu0 0.0
        %286 = vmatprep.subr.mxu0 0.0
        %287 = vmatpush2.xpose.msra.mxu0 0.0
        %288 = vmatprep.subr.mxu0 0.0
        %289 = vmatpush2.xpose.msra.mxu0 0.0
        %290 = vmatprep.subr.mxu0 0.0
        %291 = vmatpush2.xpose.msra.mxu0 0.0
        %292 = vmatprep.subr.mxu0 0.0
        %293 = vmatpush2.xpose.msra.mxu0 0.0
        %294 = vmatprep.subr.mxu0 0.0
        %295 = vmatpush2.xpose.msra.mxu0 0.0
        %296 = vmatprep.subr.mxu0 0.0
        %297 = vmatpush2.xpose.msra.mxu0 0.0
        %298 = vmatprep.subr.mxu0 0.0
        %299 = vmatpush2.xpose.msra.mxu0 0.0
        %300 = vmatprep.subr.mxu0 0.0
        %301 = vmatpush2.xpose.msra.mxu0 0.0
        %302 = vmatprep.subr.mxu0 0.0
        %303 = vmatpush2.xpose.msra.mxu0 0.0
        %304 = vmatprep.subr.mxu0 0.0
        %305 = vmatpush2.xpose.msra.mxu0 0.0
        %306 = vmatprep.subr.mxu0 0.0
        %307 = vmatpush2.xpose.msra.mxu0 0.0
        %308 = vmatprep.subr.mxu0 0.0
        %309 = vmatpush2.xpose.msra.mxu0 0.0
        %310 = vmatprep.mubr.f32.mxu0 0.0
        %311 = vmatmul.mubr.f32.gmra.mxu0 %v223
        %v312 = vpop.f32.mrf.mxu0
        %v313 = vadd.f32 %v219, %v312
        %v314 = vpop.f32.mrf.mxu0
        %315 = vmatprep.mubr.f32.mxu0 0.0
        %316 = vmatmul.mubr.f32.gmra.mxu0 %v226
        %v317 = vpop.f32.mrf.mxu0
        %v318 = vadd.f32 %v219, %v317
        %v319 = vpop.f32.mrf.mxu0
        %320 = vmatprep.mubr.f32.mxu0 0.0
        %321 = vmatmul.mubr.f32.gmra.mxu0 %v229
        %v322 = vpop.f32.mrf.mxu0
        %v323 = vadd.f32 %v219, %v322
        %v324 = vpop.f32.mrf.mxu0
        %325 = vmatprep.mubr.f32.mxu0 0.0
        %326 = vmatmul.mubr.f32.gmra.mxu0 %v232
        %v327 = vpop.f32.mrf.mxu0
        %v328 = vadd.f32 %v219, %v327
        %v329 = vpop.f32.mrf.mxu0
        %330 = vdwg.mxu0
        %v332 = vsel %vm221, %v313, 0
        %v335 = vsel %vm221, %v318, 0
        %v338 = vsel %vm221, %v323, 0
        %v341 = vsel %vm221, %v328, 0
        %343 = vmatprep.subr.mxu0 0.0
        %344 = vmatpush1.xpose.msra.mxu0 0.0
        %345 = vmatprep.subr.mxu0 0.0
        %346 = vmatpush1.xpose.msra.mxu0 0.0
        %347 = vmatprep.subr.mxu0 0.0
        %348 = vmatpush1.xpose.msra.mxu0 0.0
        %349 = vmatprep.subr.mxu0 0.0
        %350 = vmatpush1.xpose.msra.mxu0 0.0
        %351 = vmatprep.subr.mxu0 0.0
        %352 = vmatpush1.xpose.msra.mxu0 0.0
        %353 = vmatprep.subr.mxu0 0.0
        %354 = vmatpush1.xpose.msra.mxu0 0.0
        %355 = vmatprep.subr.mxu0 0.0
        %356 = vmatpush1.xpose.msra.mxu0 0.0
        %357 = vmatprep.subr.mxu0 0.0
        %358 = vmatpush1.xpose.msra.mxu0 0.0
        %359 = vmatprep.subr.mxu0 0.0
        %360 = vmatpush1.xpose.msra.mxu0 0.0
        %361 = vmatprep.subr.mxu0 0.0
        %362 = vmatpush1.xpose.msra.mxu0 0.0
        %363 = vmatprep.subr.mxu0 0.0
        %364 = vmatpush1.xpose.msra.mxu0 0.0
        %365 = vmatprep.subr.mxu0 0.0
        %366 = vmatpush1.xpose.msra.mxu0 0.0
        %367 = vmatprep.subr.mxu0 0.0
        %368 = vmatpush1.xpose.msra.mxu0 %v341
        %369 = vmatprep.subr.mxu0 0.0
        %370 = vmatpush1.xpose.msra.mxu0 %v338
        %371 = vmatprep.subr.mxu0 0.0
        %372 = vmatpush1.xpose.msra.mxu0 %v335
        %373 = vmatprep.subr.mxu0 0.0
        %374 = vmatpush1.xpose.msra.mxu0 %v332
        %375 = vmatprep.subr.mxu0 0.0
        %376 = vmatpush2.xpose.msra.mxu0 0.0
        %377 = vmatprep.subr.mxu0 0.0
        %378 = vmatpush2.xpose.msra.mxu0 0.0
        %379 = vmatprep.subr.mxu0 0.0
        %380 = vmatpush2.xpose.msra.mxu0 0.0
        %381 = vmatprep.subr.mxu0 0.0
        %382 = vmatpush2.xpose.msra.mxu0 0.0
        %383 = vmatprep.subr.mxu0 0.0
        %384 = vmatpush2.xpose.msra.mxu0 0.0
        %385 = vmatprep.subr.mxu0 0.0
        %386 = vmatpush2.xpose.msra.mxu0 0.0
        %387 = vmatprep.subr.mxu0 0.0
        %388 = vmatpush2.xpose.msra.mxu0 0.0
        %389 = vmatprep.subr.mxu0 0.0
        %390 = vmatpush2.xpose.msra.mxu0 0.0
        %391 = vmatprep.subr.mxu0 0.0
        %392 = vmatpush2.xpose.msra.mxu0 0.0
        %393 = vmatprep.subr.mxu0 0.0
        %394 = vmatpush2.xpose.msra.mxu0 0.0
        %395 = vmatprep.subr.mxu0 0.0
        %396 = vmatpush2.xpose.msra.mxu0 0.0
        %397 = vmatprep.subr.mxu0 0.0
        %398 = vmatpush2.xpose.msra.mxu0 0.0
        %399 = vmatprep.subr.mxu0 0.0
        %400 = vmatpush2.xpose.msra.mxu0 0.0
        %401 = vmatprep.subr.mxu0 0.0
        %402 = vmatpush2.xpose.msra.mxu0 0.0
        %403 = vmatprep.subr.mxu0 0.0
        %404 = vmatpush2.xpose.msra.mxu0 0.0
        %405 = vmatprep.subr.mxu0 0.0
        %406 = vmatpush2.xpose.msra.mxu0 0.0
        %407 = vmatprep.mubr.f32.mxu0 0.0
        %408 = vmatmul.mubr.f32.gmra.mxu0 %v332
        %v409 = vpop.f32.mrf.mxu0
        %v410 = vadd.f32 0.0, %v409
        %v411 = vpop.f32.mrf.mxu0
        %412 = vmatprep.mubr.f32.mxu0 0.0
        %413 = vmatmul.mubr.f32.gmra.mxu0 %v335
        %v414 = vpop.f32.mrf.mxu0
        %v415 = vadd.f32 0.0, %v414
        %v416 = vpop.f32.mrf.mxu0
        %417 = vmatprep.mubr.f32.mxu0 0.0
        %418 = vmatmul.mubr.f32.gmra.mxu0 %v338
        %v419 = vpop.f32.mrf.mxu0
        %v420 = vadd.f32 0.0, %v419
        %v421 = vpop.f32.mrf.mxu0
        %422 = vmatprep.mubr.f32.mxu0 0.0
        %423 = vmatmul.mubr.f32.gmra.mxu0 %v341
        %v424 = vpop.f32.mrf.mxu0
        %v425 = vadd.f32 0.0, %v424
        %v426 = vpop.f32.mrf.mxu0
        %427 = vdwg.mxu0
        %v428 = vlaneseq
        %v429 = vshrl.u32 %v428, 7
        %v430 = vadd.s32 %v429, 8
        %v431 = vadd.s32 %v429, 16
        %v432 = vadd.s32 %v429, 24
        %v433 = vlaneseq
        %v434 = vand.u32 %v433, 127
        %vm435 = vcmp.eq.s32.totalorder %v429, %v434
        %vm436 = vcmp.eq.s32.totalorder %v430, %v434
        %vm437 = vcmp.eq.s32.totalorder %v431, %v434
        %vm438 = vcmp.eq.s32.totalorder %v432, %v434
        %v439 = vcvt.s32.f32 %v429
        %v440 = vcvt.s32.f32 %v430
        %v441 = vcvt.s32.f32 %v431
        %v442 = vcvt.s32.f32 %v432
        %v443 = vadd.f32 %v439, 0.5
        %v444 = vadd.f32 %v440, 0.5
        %v445 = vadd.f32 %v441, 0.5
        %v446 = vadd.f32 %v442, 0.5
        %v447 = vmul.f32 %v443, 0.0625
        %v448 = vmul.f32 %v444, 0.0625
        %v449 = vmul.f32 %v445, 0.0625
        %v450 = vmul.f32 %v446, 0.0625
        %v451 = vfloor.f32 %v447
        %v452 = vfloor.f32 %v448
        %v453 = vfloor.f32 %v449
        %v454 = vfloor.f32 %v450
        %v455 = vcvt.s32.f32 %v434
        %v456 = vadd.f32 %v455, 0.5
        %v457 = vmul.f32 %v456, 0.0625
        %v458 = vfloor.f32 %v457
        %vm459 = vcmp.eq.f32.partialorder %v451, %v458
        %vm460 = vcmp.eq.f32.partialorder %v452, %v458
        %vm461 = vcmp.eq.f32.partialorder %v453, %v458
        %vm462 = vcmp.eq.f32.partialorder %v454, %v458
        %v463 = vsub.f32 %v410, 1e+08
        %v464 = vsub.f32 %v415, 1e+08
        %v465 = vsub.f32 %v420, 1e+08
        %v466 = vsub.f32 %v425, 1e+08
        %v467 = vsel %vm435, %v463, %v410
        %v468 = vsel %vm436, %v464, %v415
        %v469 = vsel %vm437, %v465, %v420
        %v470 = vsel %vm438, %v466, %v425
        %vm471 = vcmp.ge.f32.partialorder %v467, 0.0
        %vm472 = vcmp.ge.f32.partialorder %v468, 0.0
        %vm473 = vcmp.ge.f32.partialorder %v469, 0.0
        %vm474 = vcmp.ge.f32.partialorder %v470, 0.0
        %v475 = vmul.f32 %v467, 0.01
        %v476 = vmul.f32 %v468, 0.01
        %v477 = vmul.f32 %v469, 0.01
        %v478 = vmul.f32 %v470, 0.01
        %v479 = vsel %vm471, %v467, %v475
        %v480 = vsel %vm472, %v468, %v476
        %v481 = vsel %vm473, %v469, %v477
        %v482 = vsel %vm474, %v470, %v478
        %v483 = vsel %vm459, %v479, -1e+30
        %v484 = vsel %vm460, %v480, -1e+30
        %v485 = vsel %vm461, %v481, -1e+30
        %v486 = vsel %vm462, %v482, -1e+30
        %v487 = vsel %vm221, %v483, -inf
        %488 = vmax.xlane.f32.xlu0 %v487
        %v489 = vpop.xlane.xlu0 %488
        %v490 = vsel %vm221, %v484, -inf
        %491 = vmax.xlane.f32.xlu0 %v490
        %v492 = vpop.xlane.xlu0 %491
        %v493 = vsel %vm221, %v485, -inf
        %494 = vmax.xlane.f32.xlu0 %v493
        %v495 = vpop.xlane.xlu0 %494
        %v496 = vsel %vm221, %v486, -inf
        %497 = vmax.xlane.f32.xlu0 %v496
        %v498 = vpop.xlane.xlu0 %497
        %v499 = vsub.f32 %v483, %v489
        %v500 = vsub.f32 %v484, %v492
        %v501 = vsub.f32 %v485, %v495
        %v502 = vsub.f32 %v486, %v498
        %v503 = vmul.f32 %v499, 1.442695
        %v504 = vpow.pop %v503
        %v505 = vmul.f32 %v500, 1.442695
        %v506 = vpow.pop %v505
        %v507 = vmul.f32 %v501, 1.442695
        %v508 = vpow.pop %v507
        %v509 = vmul.f32 %v502, 1.442695
        %v510 = vpow.pop %v509
        %v511 = vsel %vm459, %v504, 0.0
        %v512 = vsel %vm460, %v506, 0.0
        %v513 = vsel %vm461, %v508, 0.0
        %v514 = vsel %vm462, %v510, 0.0
        %v515 = vsel %vm221, %v511, 0.0
        %516 = vadd.xlane.f32.xlu0 %v515
        %v517 = vpop.xlane.xlu0 %516
        %v518 = vsel %vm221, %v512, 0.0
        %519 = vadd.xlane.f32.xlu0 %v518
        %v520 = vpop.xlane.xlu0 %519
        %v521 = vsel %vm221, %v513, 0.0
        %522 = vadd.xlane.f32.xlu0 %v521
        %v523 = vpop.xlane.xlu0 %522
        %v524 = vsel %vm221, %v514, 0.0
        %525 = vadd.xlane.f32.xlu0 %v524
        %v526 = vpop.xlane.xlu0 %525
        %v527 = vrcp.pop %v517
        %v528 = vmul.f32 %v511, %v527
        %v529 = vrcp.pop %v520
        %v530 = vmul.f32 %v512, %v529
        %v531 = vrcp.pop %v523
        %v532 = vmul.f32 %v513, %v531
        %v533 = vrcp.pop %v526
        %v534 = vmul.f32 %v514, %v533
        %v535 = vadd.f32 %v528, 1.0
        %v536 = vadd.f32 %v530, 1.0
        %v537 = vadd.f32 %v532, 1.0
        %v538 = vadd.f32 %v534, 1.0
        %v539 = vsel %vm435, %v535, %v528
        %v540 = vsel %vm436, %v536, %v530
        %v541 = vsel %vm437, %v537, %v532
        %v542 = vsel %vm438, %v538, %v534
        %v543 = vcvt.f32.s32.to.zero.pseudo %v451
        %v544 = vcvt.f32.s32.to.zero.pseudo %v452
        %v545 = vcvt.f32.s32.to.zero.pseudo %v453
        %v546 = vcvt.f32.s32.to.zero.pseudo %v454
        %v547 = vmul.u32 %v543, 16
        %v548 = vmul.u32 %v544, 16
        %v549 = vmul.u32 %v545, 16
        %v550 = vmul.u32 %v546, 16
        %v551 = vsub.s32 %v429, %v547
        %v552 = vsub.s32 %v430, %v548
        %v553 = vsub.s32 %v431, %v549
        %v554 = vsub.s32 %v432, %v550
        %vm555 = vcmp.eq.s32.totalorder %v551, %v434
        %vm556 = vcmp.eq.s32.totalorder %v552, %v434
        %vm557 = vcmp.eq.s32.totalorder %v553, %v434
        %vm558 = vcmp.eq.s32.totalorder %v554, %v434
        %v559 = vsel %vm555, 1.0, 0.0
        %v560 = vsel %vm556, 1.0, 0.0
        %v561 = vsel %vm557, 1.0, 0.0
        %v562 = vsel %vm558, 1.0, 0.0
        %v564 = vsel %vm221, %v539, 0
        %v567 = vsel %vm221, %v540, 0
        %v570 = vsel %vm221, %v541, 0
        %v573 = vsel %vm221, %v542, 0
        %575 = vmatprep.subr.mxu0 0.0
        %576 = vmatpush1.msra.mxu0 0.0
        %577 = vmatprep.subr.mxu0 0.0
        %578 = vmatpush1.msra.mxu0 0.0
        %579 = vmatprep.subr.mxu0 0.0
        %580 = vmatpush1.msra.mxu0 0.0
        %581 = vmatprep.subr.mxu0 0.0
        %582 = vmatpush1.msra.mxu0 0.0
        %583 = vmatprep.subr.mxu0 0.0
        %584 = vmatpush1.msra.mxu0 0.0
        %585 = vmatprep.subr.mxu0 0.0
        %586 = vmatpush1.msra.mxu0 0.0
        %587 = vmatprep.subr.mxu0 0.0
        %588 = vmatpush1.msra.mxu0 0.0
        %589 = vmatprep.subr.mxu0 0.0
        %590 = vmatpush1.msra.mxu0 0.0
        %591 = vmatprep.subr.mxu0 0.0
        %592 = vmatpush1.msra.mxu0 0.0
        %593 = vmatprep.subr.mxu0 0.0
        %594 = vmatpush1.msra.mxu0 0.0
        %595 = vmatprep.subr.mxu0 0.0
        %596 = vmatpush1.msra.mxu0 0.0
        %597 = vmatprep.subr.mxu0 0.0
        %598 = vmatpush1.msra.mxu0 0.0
        %599 = vmatprep.subr.mxu0 0.0
        %600 = vmatpush1.msra.mxu0 %v562
        %601 = vmatprep.subr.mxu0 0.0
        %602 = vmatpush1.msra.mxu0 %v561
        %603 = vmatprep.subr.mxu0 0.0
        %604 = vmatpush1.msra.mxu0 %v560
        %605 = vmatprep.subr.mxu0 0.0
        %606 = vmatpush1.msra.mxu0 %v559
        %607 = vmatprep.subr.mxu0 0.0
        %608 = vmatpush2.msra.mxu0 0.0
        %609 = vmatprep.subr.mxu0 0.0
        %610 = vmatpush2.msra.mxu0 0.0
        %611 = vmatprep.subr.mxu0 0.0
        %612 = vmatpush2.msra.mxu0 0.0
        %613 = vmatprep.subr.mxu0 0.0
        %614 = vmatpush2.msra.mxu0 0.0
        %615 = vmatprep.subr.mxu0 0.0
        %616 = vmatpush2.msra.mxu0 0.0
        %617 = vmatprep.subr.mxu0 0.0
        %618 = vmatpush2.msra.mxu0 0.0
        %619 = vmatprep.subr.mxu0 0.0
        %620 = vmatpush2.msra.mxu0 0.0
        %621 = vmatprep.subr.mxu0 0.0
        %622 = vmatpush2.msra.mxu0 0.0
        %623 = vmatprep.subr.mxu0 0.0
        %624 = vmatpush2.msra.mxu0 0.0
        %625 = vmatprep.subr.mxu0 0.0
        %626 = vmatpush2.msra.mxu0 0.0
        %627 = vmatprep.subr.mxu0 0.0
        %628 = vmatpush2.msra.mxu0 0.0
        %629 = vmatprep.subr.mxu0 0.0
        %630 = vmatpush2.msra.mxu0 0.0
        %631 = vmatprep.subr.mxu0 0.0
        %632 = vmatpush2.msra.mxu0 0.0
        %633 = vmatprep.subr.mxu0 0.0
        %634 = vmatpush2.msra.mxu0 0.0
        %635 = vmatprep.subr.mxu0 0.0
        %636 = vmatpush2.msra.mxu0 0.0
        %637 = vmatprep.subr.mxu0 0.0
        %638 = vmatpush2.msra.mxu0 0.0
        %639 = vmatprep.mubr.f32.mxu0 0.0
        %640 = vmatmul.mubr.f32.gmra.mxu0 %v564
        %v641 = vpop.f32.mrf.mxu0
        %v642 = vadd.f32 0.0, %v641
        %v643 = vpop.f32.mrf.mxu0
        %644 = vmatprep.mubr.f32.mxu0 0.0
        %645 = vmatmul.mubr.f32.gmra.mxu0 %v567
        %v646 = vpop.f32.mrf.mxu0
        %v647 = vadd.f32 0.0, %v646
        %v648 = vpop.f32.mrf.mxu0
        %649 = vmatprep.mubr.f32.mxu0 0.0
        %650 = vmatmul.mubr.f32.gmra.mxu0 %v570
        %v651 = vpop.f32.mrf.mxu0
        %v652 = vadd.f32 0.0, %v651
        %v653 = vpop.f32.mrf.mxu0
        %654 = vmatprep.mubr.f32.mxu0 0.0
        %655 = vmatmul.mubr.f32.gmra.mxu0 %v573
        %v656 = vpop.f32.mrf.mxu0
        %v657 = vadd.f32 0.0, %v656
        %v658 = vpop.f32.mrf.mxu0
        %659 = vdwg.mxu0
        %v663 = vunpack.c.l.s4 1983009808
        %v664 = vunpack.c.0.s8 %v663
        %v665 = vlaneseq
        %v666 = vshrl.u32 %v665, 7
        %v667 = vsub.s32 %v664, %v666
        %v668 = vrot.slane %v642, %v667
        %v670 = vunpack.c.l.s4 1983009808
        %v671 = vunpack.c.0.s8 %v670
        %v672 = vlaneseq
        %v673 = vshrl.u32 %v672, 7
        %v674 = vsub.s32 %v671, %v673
        %v675 = vrot.slane %v652, %v674
        %vm676 = vcmask 1044484
        %v677 = vsel %vm676, %v668, %v668
        %vm678 = vcmask 1046534
        %v679 = vsel %vm678, %v668, %v677
        %v680 = vrot.slane %v675, 7
        %vm681 = vcmask 1041409
        %v682 = vsel %vm681, %v680, %v679
        %vm683 = vcmask 1043459
        %v684 = vsel %vm683, %v680, %v682
        %vm685 = vcmask 1045509
        %v686 = vsel %vm685, %v680, %v684
        %vm687 = vcmask 1047559
        %v688 = vsel %vm687, %v680, %v686
        %vm690 = vcmask 123904
        %691 = vst.msk [vmem:[%s204] sm:$0x3] %vm690, %v688
        %v692 = vrot.slane %v668, 1
        %v693 = vsel %vm676, %v692, %v692
        %v694 = vsel %vm678, %v692, %v693
        %v695 = vsel %vm681, %v675, %v694
        %v696 = vsel %vm683, %v675, %v695
        %v697 = vsel %vm685, %v675, %v696
        %v698 = vsel %vm687, %v675, %v697
        %699 = vrot.lane.b32.xlu0 %v698, 16
        %v700 = vpop.permute.xlu0 %699
        %vm702 = vcmask 255104
        %703 = vst.msk [vmem:[%s204] sm:$0x3] %vm702, %v700
        %v704 = vcombine.high %v668, %v668
        %v705 = vcombine.high %v675, %v675
        %v706 = vsel %vm676, %v704, %v704
        %v707 = vsel %vm678, %v704, %v706
        %v708 = vrot.slane %v705, 7
        %v709 = vsel %vm681, %v708, %v707
        %v710 = vsel %vm683, %v708, %v709
        %v711 = vsel %vm685, %v708, %v710
        %v712 = vsel %vm687, %v708, %v711
        %713 = vrot.lane.b32.xlu0 %v712, 32
        %v714 = vpop.permute.xlu0 %713
        %vm716 = vcmask 386304
        %717 = vst.msk [vmem:[%s204] sm:$0x3] %vm716, %v714
        %v718 = vrot.slane %v704, 1
        %v719 = vsel %vm676, %v718, %v718
        %v720 = vsel %vm678, %v718, %v719
        %v721 = vsel %vm681, %v705, %v720
        %v722 = vsel %vm683, %v705, %v721
        %v723 = vsel %vm685, %v705, %v722
        %v724 = vsel %vm687, %v705, %v723
        %725 = vrot.lane.b32.xlu0 %v724, 48
        %v726 = vpop.permute.xlu0 %725
        %vm728 = vcmask 517504
        %729 = vst.msk [vmem:[%s204] sm:$0x3] %vm728, %v726
        %v730 = vcombine.high %v642, %v642
        %v732 = vunpack.c.l.s4 1983009808
        %v733 = vunpack.c.0.s8 %v732
        %v734 = vlaneseq
        %v735 = vshrl.u32 %v734, 7
        %v736 = vsub.s32 %v733, %v735
        %v737 = vrot.slane %v730, %v736
        %v738 = vcombine.high %v652, %v652
        %v740 = vunpack.c.l.s4 1983009808
        %v741 = vunpack.c.0.s8 %v740
        %v742 = vlaneseq
        %v743 = vshrl.u32 %v742, 7
        %v744 = vsub.s32 %v741, %v743
        %v745 = vrot.slane %v738, %v744
        %v746 = vsel %vm676, %v737, %v737
        %v747 = vsel %vm678, %v737, %v746
        %v748 = vrot.slane %v745, 7
        %v749 = vsel %vm681, %v748, %v747
        %v750 = vsel %vm683, %v748, %v749
        %v751 = vsel %vm685, %v748, %v750
        %v752 = vsel %vm687, %v748, %v751
        %753 = vrot.lane.b32.xlu0 %v752, 64
        %v754 = vpop.permute.xlu0 %753
        %vm756 = vcmask 648704
        %757 = vst.msk [vmem:[%s204] sm:$0x3] %vm756, %v754
        %v758 = vrot.slane %v737, 1
        %v759 = vsel %vm676, %v758, %v758
        %v760 = vsel %vm678, %v758, %v759
        %v761 = vsel %vm681, %v745, %v760
        %v762 = vsel %vm683, %v745, %v761
        %v763 = vsel %vm685, %v745, %v762
        %v764 = vsel %vm687, %v745, %v763
        %765 = vrot.lane.b32.xlu0 %v764, 80
        %v766 = vpop.permute.xlu0 %765
        %vm768 = vcmask 779904
        %769 = vst.msk [vmem:[%s204] sm:$0x3] %vm768, %v766
        %v770 = vcombine.high %v737, %v737
        %v771 = vcombine.high %v745, %v745
        %v772 = vsel %vm676, %v770, %v770
        %v773 = vsel %vm678, %v770, %v772
        %v774 = vrot.slane %v771, 7
        %v775 = vsel %vm681, %v774, %v773
        %v776 = vsel %vm683, %v774, %v775
        %v777 = vsel %vm685, %v774, %v776
        %v778 = vsel %vm687, %v774, %v777
        %779 = vrot.lane.b32.xlu0 %v778, 96
        %v780 = vpop.permute.xlu0 %779
        %vm782 = vcmask 911104
        %783 = vst.msk [vmem:[%s204] sm:$0x3] %vm782, %v780
        %v784 = vrot.slane %v770, 1
        %v785 = vsel %vm676, %v784, %v784
        %v786 = vsel %vm678, %v784, %v785
        %v787 = vsel %vm681, %v771, %v786
        %v788 = vsel %vm683, %v771, %v787
        %v789 = vsel %vm685, %v771, %v788
        %v790 = vsel %vm687, %v771, %v789
        %791 = vrot.lane.b32.xlu0 %v790, 112
        %v792 = vpop.permute.xlu0 %791
        %vm794 = vcmask 1042304
        %795 = vst.msk [vmem:[%s204] sm:$0x3] %vm794, %v792
        %v799 = vunpack.c.l.s4 1983009808
        %v800 = vunpack.c.0.s8 %v799
        %v801 = vlaneseq
        %v802 = vshrl.u32 %v801, 7
        %v803 = vsub.s32 %v800, %v802
        %v804 = vrot.slane %v647, %v803
        %v806 = vunpack.c.l.s4 1983009808
        %v807 = vunpack.c.0.s8 %v806
        %v808 = vlaneseq
        %v809 = vshrl.u32 %v808, 7
        %v810 = vsub.s32 %v807, %v809
        %v811 = vrot.slane %v657, %v810
        %v812 = vsel %vm676, %v804, %v804
        %v813 = vsel %vm678, %v804, %v812
        %v814 = vrot.slane %v811, 7
        %v815 = vsel %vm681, %v814, %v813
        %v816 = vsel %vm683, %v814, %v815
        %v817 = vsel %vm685, %v814, %v816
        %v818 = vsel %vm687, %v814, %v817
        %820 = vst.msk [vmem:[%s204 + $0x2] sm:$0x3] %vm690, %v818
        %v821 = vrot.slane %v804, 1
        %v822 = vsel %vm676, %v821, %v821
        %v823 = vsel %vm678, %v821, %v822
        %v824 = vsel %vm681, %v811, %v823
        %v825 = vsel %vm683, %v811, %v824
        %v826 = vsel %vm685, %v811, %v825
        %v827 = vsel %vm687, %v811, %v826
        %828 = vrot.lane.b32.xlu0 %v827, 16
        %v829 = vpop.permute.xlu0 %828
        %831 = vst.msk [vmem:[%s204 + $0x2] sm:$0x3] %vm702, %v829
        %v832 = vcombine.high %v804, %v804
        %v833 = vcombine.high %v811, %v811
        %v834 = vsel %vm676, %v832, %v832
        %v835 = vsel %vm678, %v832, %v834
        %v836 = vrot.slane %v833, 7
        %v837 = vsel %vm681, %v836, %v835
        %v838 = vsel %vm683, %v836, %v837
        %v839 = vsel %vm685, %v836, %v838
        %v840 = vsel %vm687, %v836, %v839
        %841 = vrot.lane.b32.xlu0 %v840, 32
        %v842 = vpop.permute.xlu0 %841
        %844 = vst.msk [vmem:[%s204 + $0x2] sm:$0x3] %vm716, %v842
        %v845 = vrot.slane %v832, 1
        %v846 = vsel %vm676, %v845, %v845
        %v847 = vsel %vm678, %v845, %v846
        %v848 = vsel %vm681, %v833, %v847
        %v849 = vsel %vm683, %v833, %v848
        %v850 = vsel %vm685, %v833, %v849
        %v851 = vsel %vm687, %v833, %v850
        %852 = vrot.lane.b32.xlu0 %v851, 48
        %v853 = vpop.permute.xlu0 %852
        %855 = vst.msk [vmem:[%s204 + $0x2] sm:$0x3] %vm728, %v853
        %v856 = vcombine.high %v647, %v647
        %v858 = vunpack.c.l.s4 1983009808
        %v859 = vunpack.c.0.s8 %v858
        %v860 = vlaneseq
        %v861 = vshrl.u32 %v860, 7
        %v862 = vsub.s32 %v859, %v861
        %v863 = vrot.slane %v856, %v862
        %v864 = vcombine.high %v657, %v657
        %v866 = vunpack.c.l.s4 1983009808
        %v867 = vunpack.c.0.s8 %v866
        %v868 = vlaneseq
        %v869 = vshrl.u32 %v868, 7
        %v870 = vsub.s32 %v867, %v869
        %v871 = vrot.slane %v864, %v870
        %v872 = vsel %vm676, %v863, %v863
        %v873 = vsel %vm678, %v863, %v872
        %v874 = vrot.slane %v871, 7
        %v875 = vsel %vm681, %v874, %v873
        %v876 = vsel %vm683, %v874, %v875
        %v877 = vsel %vm685, %v874, %v876
        %v878 = vsel %vm687, %v874, %v877
        %879 = vrot.lane.b32.xlu0 %v878, 64
        %v880 = vpop.permute.xlu0 %879
        %882 = vst.msk [vmem:[%s204 + $0x2] sm:$0x3] %vm756, %v880
        %v883 = vrot.slane %v863, 1
        %v884 = vsel %vm676, %v883, %v883
        %v885 = vsel %vm678, %v883, %v884
        %v886 = vsel %vm681, %v871, %v885
        %v887 = vsel %vm683, %v871, %v886
        %v888 = vsel %vm685, %v871, %v887
        %v889 = vsel %vm687, %v871, %v888
        %890 = vrot.lane.b32.xlu0 %v889, 80
        %v891 = vpop.permute.xlu0 %890
        %893 = vst.msk [vmem:[%s204 + $0x2] sm:$0x3] %vm768, %v891
        %v894 = vcombine.high %v863, %v863
        %v895 = vcombine.high %v871, %v871
        %v896 = vsel %vm676, %v894, %v894
        %v897 = vsel %vm678, %v894, %v896
        %v898 = vrot.slane %v895, 7
        %v899 = vsel %vm681, %v898, %v897
        %v900 = vsel %vm683, %v898, %v899
        %v901 = vsel %vm685, %v898, %v900
        %v902 = vsel %vm687, %v898, %v901
        %903 = vrot.lane.b32.xlu0 %v902, 96
        %v904 = vpop.permute.xlu0 %903
        %906 = vst.msk [vmem:[%s204 + $0x2] sm:$0x3] %vm782, %v904
        %v907 = vrot.slane %v894, 1
        %v908 = vsel %vm676, %v907, %v907
        %v909 = vsel %vm678, %v907, %v908
        %v910 = vsel %vm681, %v895, %v909
        %v911 = vsel %vm683, %v895, %v910
        %v912 = vsel %vm685, %v895, %v911
        %v913 = vsel %vm687, %v895, %v912
        %914 = vrot.lane.b32.xlu0 %v913, 112
        %v915 = vpop.permute.xlu0 %914
        %917 = vst.msk [vmem:[%s204 + $0x2] sm:$0x3] %vm794, %v915
        %s918 = sand.u32 %s97, 1
        %s919 = scalar_lea.sflag [#allocation4], %s918
        %s920 = sand.u32 %s97, 1
        %s921 = smul.addr %s920, 4
        %s922 = scalar_lea.vmem [#allocation7], %s921
        // Predicated region
        $region41: #{tpu_custom_call.1} parent=31 // pred_check
          %p923 = pneg %p107
        $region42: #{tpu_custom_call.1} parent=31 // pred_check_branch
          %925 = sbr.rel (%p923) target = $region44
        $region43: #{tpu_custom_call.1} parent=31 // pred_region
          %s927 = ssub.s32 64, 64
          %928 = vsyncadd %s919, %s927
          %s929 = smul.addr %s21, 2
          %s930 = smul.addr %s929, 32
          %s931 = scalar_lea.hbm %s3, %s930
          %s933 = sshll.u32 %s922, 4
          %s934 = int_to_ptr.vmem [resolvable:$true] %s933
          %936 = dma.vmem_to_hbm [thread:$0]  %s934, 64, %s931, %s919
        $region44: #{tpu_custom_call.1} parent=31 // pred_fallthru
          _
      $region32: #{tpu_custom_call.1} parent=5 // pred_fallthru
        _
      %p937 = scmp.le.s32.totalorder 2, %s16
      // Predicated region
      $region45: #{tpu_custom_call.1} parent=5 // pred_check
        %p938 = pneg %p937
      $region46: #{tpu_custom_call.1} parent=5 // pred_check_branch
        %940 = sbr.rel (%p938) target = $region48
      $region47: #{tpu_custom_call.1} parent=5 // pred_region
        %s941 = ssub.s32 %s16, 2
        // Predicated region
        $region49: #{tpu_custom_call.1} parent=47 // pred_check
          %p942 = pneg %p113
        $region50: #{tpu_custom_call.1} parent=47 // pred_check_branch
          %944 = sbr.rel (%p942) target = $region52
        $region51: #{tpu_custom_call.1} parent=47 // pred_region
          %s945 = sand.u32 %s98, 1
          %s946 = scalar_lea.sflag [#allocation4], %s945
          %s947 = sand.u32 %s98, 1
          %s948 = smul.addr %s947, 4
          %s949 = scalar_lea.vmem [#allocation7], %s948
          %950 = dma.done %s946, 64
        $region52: #{tpu_custom_call.1} parent=47 // pred_fallthru
          _
      $region48: #{tpu_custom_call.1} parent=5 // pred_fallthru
        _
    $region6: #{tpu_custom_call.1} parent=1 // loop_footer
      %s20 = sadd.s32 1, %s16
    $region7: #{tpu_custom_call.1} parent=1 // loop_footer_branch
      %15 = sbr.rel target = $region3
    $region8: #{tpu_custom_call.1} parent=1 // loop_exit
      _
    %951 = vsyncpa [#allocation3], 1
    %s952 = scalar_lea.sflag [#allocation3], 1
    %953 = vsyncpa %s952, 1
    %954 = vsyncpa [#allocation6], 1
    %955 = vsyncpa [#allocation4], 1
    %s956 = scalar_lea.sflag [#allocation4], 1
    %957 = vsyncpa %s956, 1

</llo_original>
